<compile_context>
chip_gen: v7x
topology: tpu7x:2x2x1
jax: 0.10.0
libtpu: 0.0.40
codegen_flags: <defaults>
</compile_context>

<pallas_src>
import jax
import jax.numpy as jnp
from jax.experimental import pallas as pl
from jax.experimental.pallas import tpu as pltpu


def _mlp_softmax_kernel(x_t_ref, w1_ref, b1_ref, w2_ref, b2_ref, o_t_ref):
    """Transposed layout: batch on the lane (last) axis everywhere.

    x_t_ref : [in_size, batch_tile]
    w1_ref  : [hidden, in_size]      (PyTorch orientation, resident)
    b1_ref  : [hidden, 1]
    w2_ref  : [out_size, hidden]     (resident)
    b2_ref  : [out_size, 1]
    o_t_ref : [out_size, batch_tile]
    """
    # First linear + ReLU:  h^T = W1 @ x^T + b1   (MXU, f32 accumulation).
    h = jnp.dot(w1_ref[...], x_t_ref[...], preferred_element_type=jnp.float32)
    h = jnp.maximum(h + b1_ref[...], 0.0)          # (hidden, 1) broadcasts over lanes

    # Second linear: logits^T = W2 @ h^T + b2.
    logits = jnp.dot(w2_ref[...], h.astype(w2_ref.dtype),
                     preferred_element_type=jnp.float32)
    logits = logits + b2_ref[...]                   # (out_size, batch_tile)

    # Numerically-stable softmax over the out_size axis (sublanes).  out_size
    # is small & static, so unroll into pure VPU maximum/add chains -- no
    # cross-lane reduce needed.
    out_size = logits.shape[0]
    m = logits[0:1, :]
    for r in range(1, out_size):
        m = jnp.maximum(m, logits[r:r + 1, :])
    e = jnp.exp(logits - m)
    denom = e[0:1, :]
    for r in range(1, out_size):
        denom = denom + e[r:r + 1, :]
    # Exact division: guarantees rows sum to 1 to float32 precision.  The
    # kernel is HBM-bound on the x tile, so the divide is hidden anyway.
    o_t_ref[...] = (e / denom).astype(o_t_ref.dtype)


def survival_predictor_forward(x, w1, b1, w2, b2, *, batch_tile=None, use_bf16=False):
    """Forward pass.

    x  : [B, input_size]
    w1 : [hidden, input_size]   (torch.nn.Linear .weight orientation)
    b1 : [hidden]
    w2 : [output, hidden]
    b2 : [output]
    Returns softmax probabilities, shape [B, output], float32.
    """
    B, in_size = x.shape
    hidden = w1.shape[0]
    out_size = w2.shape[0]

    if batch_tile is None:
        batch_tile = B
        for t in (2048, 1024, 512, 256, 128):
            if B % t == 0:
                batch_tile = t
                break
    assert B % batch_tile == 0, "batch_tile must divide B"
    # batch_tile sits on the lane axis of the x^T / out^T blocks.
    assert batch_tile == B or batch_tile % 128 == 0, (
        "batch_tile must equal B or be a multiple of 128")

    compute_dtype = jnp.bfloat16 if use_bf16 else jnp.float32

    # Wrapper-side layout plumbing: batch goes onto the lane axis.
    x_t = x.T.astype(compute_dtype)                         # [in_size, B]
    w1c = w1.astype(compute_dtype)                          # [hidden, in_size]
    w2c = w2.astype(compute_dtype)                          # [out_size, hidden]
    b1c = b1.reshape(hidden, 1).astype(jnp.float32)
    b2c = b2.reshape(out_size, 1).astype(jnp.float32)

    itemsize = 2 if use_bf16 else 4
    cost = pl.CostEstimate(
        flops=2 * B * (in_size * hidden + hidden * out_size),
        transcendentals=B * out_size,
        bytes_accessed=(B * in_size * itemsize                 # x
                        + (hidden * in_size + out_size * hidden) * itemsize  # weights
                        + (hidden + out_size) * 4               # biases
                        + B * out_size * 4),                    # output
    )

    grid = (B // batch_tile,)
    out_t = pl.pallas_call(
        _mlp_softmax_kernel,
        out_shape=jax.ShapeDtypeStruct((out_size, B), jnp.float32),
        grid_spec=pltpu.PrefetchScalarGridSpec(
            num_scalar_prefetch=0,
            grid=grid,
            in_specs=[
                pl.BlockSpec((in_size, batch_tile), lambda i: (0, i)),   # x^T tile
                pl.BlockSpec((hidden, in_size), lambda i: (0, 0)),       # W1 (resident)
                pl.BlockSpec((hidden, 1), lambda i: (0, 0)),             # b1
                pl.BlockSpec((out_size, hidden), lambda i: (0, 0)),      # W2 (resident)
                pl.BlockSpec((out_size, 1), lambda i: (0, 0)),           # b2
            ],
            out_specs=pl.BlockSpec((out_size, batch_tile), lambda i: (0, i)),
        ),
        compiler_params=pltpu.CompilerParams(
            # Batch axis is independent -> megacore sharding on v7x when grid > 1.
            dimension_semantics=("parallel",),
        ),
        cost_estimate=cost,
    )(x_t, w1c, b1c, w2c, b2c)

    return out_t.T                                           # back to [B, out_size]


def init_params(key, input_size, hidden_size, output_size):
    """torch.nn.Linear-style init: uniform(-1/sqrt(fan_in), 1/sqrt(fan_in)).
    Weights kept in PyTorch [out_features, in_features] orientation."""
    k1, k2, k3, k4 = jax.random.split(key, 4)
    bound1 = 1.0 / (input_size ** 0.5)
    bound2 = 1.0 / (hidden_size ** 0.5)
    w1 = jax.random.uniform(k1, (hidden_size, input_size), jnp.float32, -bound1, bound1)
    b1 = jax.random.uniform(k2, (hidden_size,), jnp.float32, -bound1, bound1)
    w2 = jax.random.uniform(k3, (output_size, hidden_size), jnp.float32, -bound2, bound2)
    b2 = jax.random.uniform(k4, (output_size,), jnp.float32, -bound2, bound2)
    return w1, b1, w2, b2


def reference_forward(x, w1, b1, w2, b2):
    h = jnp.maximum(x @ w1.T + b1, 0.0)
    logits = h @ w2.T + b2
    return jax.nn.softmax(logits, axis=-1)


if __name__ == "__main__":
    input_size, hidden_size, output_size = 16, 32, 4

    key = jax.random.PRNGKey(0)
    kx, kp, kx2 = jax.random.split(key, 3)
    w1, b1, w2, b2 = init_params(kp, input_size, hidden_size, output_size)

    # 1) Toy shape consistent with the module: batch=8 (single grid step).
    x_small = jax.random.normal(kx, (8, input_size), jnp.float32)
    out_small = jax.block_until_ready(
        survival_predictor_forward(x_small, w1, b1, w2, b2))
    ref_small = reference_forward(x_small, w1, b1, w2, b2)
    assert out_small.shape == (8, output_size)
    assert jnp.allclose(out_small, ref_small, atol=1e-3, rtol=1e-3), \
        "small-batch mismatch vs pure-JAX reference"
    # Exact softmax division -> rows sum to 1 to f32 precision.
    assert jnp.allclose(jnp.sum(out_small, axis=-1), 1.0, atol=1e-5)

    # 2) Slightly larger batch exercises the tiled / pipelined (grid > 1) path.
    x_big = jax.random.normal(kx2, (256, input_size), jnp.float32)
    out_big = jax.block_until_ready(
        survival_predictor_forward(x_big, w1, b1, w2, b2, batch_tile=128))
    ref_big = reference_forward(x_big, w1, b1, w2, b2)
    assert out_big.shape == (256, output_size)
    assert jnp.allclose(out_big, ref_big, atol=1e-3, rtol=1e-3), \
        "tiled-batch mismatch vs pure-JAX reference"
    assert jnp.allclose(jnp.sum(out_big, axis=-1), 1.0, atol=1e-5)

    print("KERNEL_OK")
</pallas_src>

<mosaic_0001>
module attributes {stable_mosaic.version = 11 : i64} {
  func.func @_mlp_softmax_kernel(%arg0: i32, %arg1: memref<16x8xf32, #tpu.memory_space<vmem>>, %arg2: memref<32x16xf32, #tpu.memory_space<vmem>>, %arg3: memref<32x1xf32, #tpu.memory_space<vmem>>, %arg4: memref<4x32xf32, #tpu.memory_space<vmem>>, %arg5: memref<4x1xf32, #tpu.memory_space<vmem>>, %arg6: memref<4x8xf32, #tpu.memory_space<vmem>>) attributes {dimension_semantics = [#tpu.dimension_semantics<parallel>], iteration_bounds = array<i64: 1>, scalar_prefetch = 0 : i64, scratch_operands = 0 : i64, tpu.core_type = #tpu.core_type<tc>, window_params = [{transform_indices = @transform_0, window_bounds = array<i64: 16, 8>}, {pipeline_mode = #tpu.pipeline_mode<synchronous>, transform_indices = @transform_1, window_bounds = array<i64: 32, 16>}, {pipeline_mode = #tpu.pipeline_mode<synchronous>, transform_indices = @transform_2, window_bounds = array<i64: 32, 1>}, {pipeline_mode = #tpu.pipeline_mode<synchronous>, transform_indices = @transform_3, window_bounds = array<i64: 4, 32>}, {pipeline_mode = #tpu.pipeline_mode<synchronous>, transform_indices = @transform_4, window_bounds = array<i64: 4, 1>}, {transform_indices = @transform_5, window_bounds = array<i64: 4, 8>}]} {
    %c0 = arith.constant 0 : index
    %c0_0 = arith.constant 0 : index
    %0 = vector.load %arg2[%c0, %c0_0] : memref<32x16xf32, #tpu.memory_space<vmem>>, vector<32x16xf32>
    %c0_1 = arith.constant 0 : index
    %c0_2 = arith.constant 0 : index
    %1 = vector.load %arg1[%c0_1, %c0_2] : memref<16x8xf32, #tpu.memory_space<vmem>>, vector<16x8xf32>
    %cst = arith.constant dense<0.000000e+00> : vector<32x8xf32>
    %2 = tpu.matmul %0, %1, %cst {dimension_numbers = #tpu.dot_dimension_numbers<[1], [0], [0], [1], [0, 0, 1, 1], [], []>} : vector<32x16xf32>, vector<16x8xf32>, vector<32x8xf32> -> vector<32x8xf32>
    %c0_3 = arith.constant 0 : index
    %c0_4 = arith.constant 0 : index
    %3 = vector.load %arg3[%c0_3, %c0_4] : memref<32x1xf32, #tpu.memory_space<vmem>>, vector<32x1xf32>
    %4 = vector.broadcast %3 : vector<32x1xf32> to vector<32x8xf32>
    %5 = arith.addf %2, %4 : vector<32x8xf32>
    %cst_5 = arith.constant 0.000000e+00 : f32
    %6 = vector.broadcast %cst_5 : f32 to vector<32x8xf32>
    %7 = arith.maximumf %5, %6 : vector<32x8xf32>
    %c0_6 = arith.constant 0 : index
    %c0_7 = arith.constant 0 : index
    %8 = vector.load %arg4[%c0_6, %c0_7] : memref<4x32xf32, #tpu.memory_space<vmem>>, vector<4x32xf32>
    %cst_8 = arith.constant dense<0.000000e+00> : vector<4x8xf32>
    %9 = tpu.matmul %8, %7, %cst_8 {dimension_numbers = #tpu.dot_dimension_numbers<[1], [0], [0], [1], [0, 0, 1, 1], [], []>} : vector<4x32xf32>, vector<32x8xf32>, vector<4x8xf32> -> vector<4x8xf32>
    %c0_9 = arith.constant 0 : index
    %c0_10 = arith.constant 0 : index
    %10 = vector.load %arg5[%c0_9, %c0_10] : memref<4x1xf32, #tpu.memory_space<vmem>>, vector<4x1xf32>
    %11 = vector.broadcast %10 : vector<4x1xf32> to vector<4x8xf32>
    %12 = arith.addf %9, %11 : vector<4x8xf32>
    %13 = vector.extract_strided_slice %12 {offsets = [0, 0], sizes = [1, 8], strides = [1, 1]} : vector<4x8xf32> to vector<1x8xf32>
    %14 = vector.extract_strided_slice %12 {offsets = [1, 0], sizes = [1, 8], strides = [1, 1]} : vector<4x8xf32> to vector<1x8xf32>
    %15 = arith.maximumf %13, %14 : vector<1x8xf32>
    %16 = vector.extract_strided_slice %12 {offsets = [2, 0], sizes = [1, 8], strides = [1, 1]} : vector<4x8xf32> to vector<1x8xf32>
    %17 = arith.maximumf %15, %16 : vector<1x8xf32>
    %18 = vector.extract_strided_slice %12 {offsets = [3, 0], sizes = [1, 8], strides = [1, 1]} : vector<4x8xf32> to vector<1x8xf32>
    %19 = arith.maximumf %17, %18 : vector<1x8xf32>
    %20 = vector.broadcast %19 : vector<1x8xf32> to vector<4x8xf32>
    %21 = arith.subf %12, %20 : vector<4x8xf32>
    %22 = math.exp %21 : vector<4x8xf32>
    %23 = vector.extract_strided_slice %22 {offsets = [0, 0], sizes = [1, 8], strides = [1, 1]} : vector<4x8xf32> to vector<1x8xf32>
    %24 = vector.extract_strided_slice %22 {offsets = [1, 0], sizes = [1, 8], strides = [1, 1]} : vector<4x8xf32> to vector<1x8xf32>
    %25 = arith.addf %23, %24 : vector<1x8xf32>
    %26 = vector.extract_strided_slice %22 {offsets = [2, 0], sizes = [1, 8], strides = [1, 1]} : vector<4x8xf32> to vector<1x8xf32>
    %27 = arith.addf %25, %26 : vector<1x8xf32>
    %28 = vector.extract_strided_slice %22 {offsets = [3, 0], sizes = [1, 8], strides = [1, 1]} : vector<4x8xf32> to vector<1x8xf32>
    %29 = arith.addf %27, %28 : vector<1x8xf32>
    %30 = vector.broadcast %29 : vector<1x8xf32> to vector<4x8xf32>
    %31 = arith.divf %22, %30 : vector<4x8xf32>
    %c0_11 = arith.constant 0 : index
    %c0_12 = arith.constant 0 : index
    %32 = vector.load %arg6[%c0_11, %c0_12] : memref<4x8xf32, #tpu.memory_space<vmem>>, vector<4x8xf32>
    tpu.vector_store %arg6[%c0_11, %c0_12], %31 {strides = array<i32>} : memref<4x8xf32, #tpu.memory_space<vmem>>, vector<4x8xf32>,
    return
  }
  func.func @transform_0(%arg0: i32) -> (i32, i32) {
    %c0_i32 = arith.constant 0 : i32
    %c0_i32_0 = arith.constant 0 : i32
    return %c0_i32, %arg0 : i32, i32
  }
  func.func @transform_1(%arg0: i32) -> (i32, i32) {
    %c0_i32 = arith.constant 0 : i32
    %c0_i32_0 = arith.constant 0 : i32
    %c0_i32_1 = arith.constant 0 : i32
    return %c0_i32, %c0_i32_0 : i32, i32
  }
  func.func @transform_2(%arg0: i32) -> (i32, i32) {
    %c0_i32 = arith.constant 0 : i32
    %c0_i32_0 = arith.constant 0 : i32
    %c0_i32_1 = arith.constant 0 : i32
    return %c0_i32, %c0_i32_0 : i32, i32
  }
  func.func @transform_3(%arg0: i32) -> (i32, i32) {
    %c0_i32 = arith.constant 0 : i32
    %c0_i32_0 = arith.constant 0 : i32
    %c0_i32_1 = arith.constant 0 : i32
    return %c0_i32, %c0_i32_0 : i32, i32
  }
  func.func @transform_4(%arg0: i32) -> (i32, i32) {
    %c0_i32 = arith.constant 0 : i32
    %c0_i32_0 = arith.constant 0 : i32
    %c0_i32_1 = arith.constant 0 : i32
    return %c0_i32, %c0_i32_0 : i32, i32
  }
  func.func @transform_5(%arg0: i32) -> (i32, i32) {
    %c0_i32 = arith.constant 0 : i32
    %c0_i32_0 = arith.constant 0 : i32
    return %c0_i32, %arg0 : i32, i32
  }
}

</mosaic_0001>

<llo_original>
// kernel: tpu_custom_call.1
$region0: #{tpu_custom_call.1}
  #allocation0 [shape = 'u32[]', space=smem, size = 0x4, offset = 0x4, fixed_abs, tag = 'smem constant byte address 0x4 - core index']
  #allocation1 [shape = 'u32[144,128]{1,0:T(1,128)}', space=vmem, size = 0x12000, scoped, tag = 'internal scratch']
  %s0 = inlined_call_operand.vmem [shape: f32[16,8], index: 0, kind: input, shape index: {}]
  %s1 = inlined_call_operand.vmem [shape: f32[32,16], index: 1, kind: input, shape index: {}]
  %s2 = inlined_call_operand.vmem [shape: f32[32,1], index: 2, kind: input, shape index: {}]
  %s3 = inlined_call_operand.vmem [shape: f32[4,32], index: 3, kind: input, shape index: {}]
  %s4 = inlined_call_operand.vmem [shape: f32[4,1], index: 4, kind: input, shape index: {}]
  %s5 = inlined_call_operand.hbm [shape: f32[4,8], index: 5, kind: output, shape index: {}]
  %s6 = sld [smem:[#allocation0]]
  $region30: #{tpu_custom_call.1} parent=0
    _
  %s8 = ssub.s32 1, %s6
  %s9 = scalar_select 0, %s8, %s6
  $region1: #{tpu_custom_call.1} parent=0
    #allocation2 [shape = 'u8[2048]{0}', space=vmem, size = 0x800, scoped, tag = 'output window, operand 0, single buffered']
    #allocation3 [shape = 's32[1]{0}', space=sflag, size = 0x4, scoped, tag = 'scoped memory for tpu_custom_call.1']
    %10 = vsyncpa [#allocation3], 0
    // Predicated region
    $region2: #{tpu_custom_call.1} parent=1 // pred_check
      _
    $region3: #{tpu_custom_call.1} parent=1 // pred_check_branch
      %12 = sbr.rel (0) target = $region5
    $region4: #{tpu_custom_call.1} parent=1 // pred_region
      _
    $region5: #{tpu_custom_call.1} parent=1 // pred_fallthru
      _
    // Predicated region
    $region6: #{tpu_custom_call.1} parent=1 // pred_check
      _
    $region7: #{tpu_custom_call.1} parent=1 // pred_check_branch
      %14 = sbr.rel (0) target = $region9
    $region8: #{tpu_custom_call.1} parent=1 // pred_region
      _
    $region9: #{tpu_custom_call.1} parent=1 // pred_fallthru
      _
    // Predicated region
    $region10: #{tpu_custom_call.1} parent=1 // pred_check
      _
    $region11: #{tpu_custom_call.1} parent=1 // pred_check_branch
      %16 = sbr.rel (0) target = $region13
    $region12: #{tpu_custom_call.1} parent=1 // pred_region
      _
    $region13: #{tpu_custom_call.1} parent=1 // pred_fallthru
      _
    // Predicated region
    $region14: #{tpu_custom_call.1} parent=1 // pred_check
      _
    $region15: #{tpu_custom_call.1} parent=1 // pred_check_branch
      %18 = sbr.rel (0) target = $region17
    $region16: #{tpu_custom_call.1} parent=1 // pred_region
      _
    $region17: #{tpu_custom_call.1} parent=1 // pred_fallthru
      _
    // Predicated region
    $region18: #{tpu_custom_call.1} parent=1 // pred_check
      _
    $region19: #{tpu_custom_call.1} parent=1 // pred_check_branch
      %20 = sbr.rel (0) target = $region21
    $region20: #{tpu_custom_call.1} parent=1 // pred_region
      _
    $region21: #{tpu_custom_call.1} parent=1 // pred_fallthru
      _
    %v21 = vld [vmem:[%s1] sm:$0xff]
    %v22 = vld [vmem:[%s1 + $0x8] sm:$0xff]
    %v23 = vld [vmem:[%s1 + $0x10] sm:$0xff]
    %v24 = vld [vmem:[%s1 + $0x18] sm:$0xff]
    %v25 = vld [vmem:[%s0] sm:$0xff]
    %v26 = vld [vmem:[%s0 + $0x8] sm:$0xff]
    %v27 = vld [vmem:[%s2] sm:$0xff]
    %v28 = vld [vmem:[%s2 + $0x8] sm:$0xff]
    %v29 = vld [vmem:[%s2 + $0x10] sm:$0xff]
    %v30 = vld [vmem:[%s2 + $0x18] sm:$0xff]
    %32 = vset.pattern.permute.xlu0 0
    %33 = vperm.xlu0 %32, %v27
    %v34 = vpop.permute.xlu0 %33
    %37 = vset.pattern.permute.xlu0 0
    %38 = vperm.xlu0 %37, %v28
    %v39 = vpop.permute.xlu0 %38
    %42 = vset.pattern.permute.xlu0 0
    %43 = vperm.xlu0 %42, %v29
    %v44 = vpop.permute.xlu0 %43
    %47 = vset.pattern.permute.xlu0 0
    %48 = vperm.xlu0 %47, %v30
    %v49 = vpop.permute.xlu0 %48
    %vm51 = vcmask 130048
    %v53 = vsel %vm51, %v21, 0
    %v56 = vsel %vm51, %v22, 0
    %v59 = vsel %vm51, %v23, 0
    %v62 = vsel %vm51, %v24, 0
    %64 = vmatprep.subr.mxu0 0.0
    %65 = vmatpush1.msra.mxu0 %v25
    %66 = vmatprep.subr.mxu0 0.0
    %67 = vmatpush1.msra.mxu0 %v26
    %68 = vmatprep.subr.mxu0 0.0
    %69 = vmatpush1.msra.mxu0 0.0
    %70 = vmatprep.subr.mxu0 0.0
    %71 = vmatpush1.msra.mxu0 0.0
    %72 = vmatprep.subr.mxu0 0.0
    %73 = vmatpush1.msra.mxu0 0.0
    %74 = vmatprep.subr.mxu0 0.0
    %75 = vmatpush1.msra.mxu0 0.0
    %76 = vmatprep.subr.mxu0 0.0
    %77 = vmatpush1.msra.mxu0 0.0
    %78 = vmatprep.subr.mxu0 0.0
    %79 = vmatpush1.msra.mxu0 0.0
    %80 = vmatprep.subr.mxu0 0.0
    %81 = vmatpush1.msra.mxu0 0.0
    %82 = vmatprep.subr.mxu0 0.0
    %83 = vmatpush1.msra.mxu0 0.0
    %84 = vmatprep.subr.mxu0 0.0
    %85 = vmatpush1.msra.mxu0 0.0
    %86 = vmatprep.subr.mxu0 0.0
    %87 = vmatpush1.msra.mxu0 0.0
    %88 = vmatprep.subr.mxu0 0.0
    %89 = vmatpush1.msra.mxu0 0.0
    %90 = vmatprep.subr.mxu0 0.0
    %91 = vmatpush1.msra.mxu0 0.0
    %92 = vmatprep.subr.mxu0 0.0
    %93 = vmatpush1.msra.mxu0 0.0
    %94 = vmatprep.subr.mxu0 0.0
    %95 = vmatpush1.msra.mxu0 0.0
    %96 = vmatprep.subr.mxu0 0.0
    %97 = vmatpush1.msra.mxu0 0.0
    %98 = vmatprep.subr.mxu0 0.0
    %99 = vmatpush1.msra.mxu0 0.0
    %100 = vmatprep.subr.mxu0 0.0
    %101 = vmatpush1.msra.mxu0 0.0
    %102 = vmatprep.subr.mxu0 0.0
    %103 = vmatpush1.msra.mxu0 0.0
    %104 = vmatprep.subr.mxu0 0.0
    %105 = vmatpush1.msra.mxu0 0.0
    %106 = vmatprep.subr.mxu0 0.0
    %107 = vmatpush1.msra.mxu0 0.0
    %108 = vmatprep.subr.mxu0 0.0
    %109 = vmatpush1.msra.mxu0 0.0
    %110 = vmatprep.subr.mxu0 0.0
    %111 = vmatpush1.msra.mxu0 0.0
    %112 = vmatprep.subr.mxu0 0.0
    %113 = vmatpush1.msra.mxu0 0.0
    %114 = vmatprep.subr.mxu0 0.0
    %115 = vmatpush1.msra.mxu0 0.0
    %116 = vmatprep.subr.mxu0 0.0
    %117 = vmatpush1.msra.mxu0 0.0
    %118 = vmatprep.subr.mxu0 0.0
    %119 = vmatpush1.msra.mxu0 0.0
    %120 = vmatprep.subr.mxu0 0.0
    %121 = vmatpush1.msra.mxu0 0.0
    %122 = vmatprep.subr.mxu0 0.0
    %123 = vmatpush1.msra.mxu0 0.0
    %124 = vmatprep.subr.mxu0 0.0
    %125 = vmatpush1.msra.mxu0 0.0
    %126 = vmatprep.subr.mxu0 0.0
    %127 = vmatpush1.msra.mxu0 0.0
    %128 = vmatprep.mubr.f32.mxu0 0.0
    %129 = vmatmul.mubr.f32.gmra.mrb[0].mxu0 %v53
    %v130 = vpop.f32.mrb[0].mxu0
    %v131 = vadd.f32 %v34, %v130
    %v132 = vpop.f32.mrb[0].mxu0
    %133 = vmatprep.mubr.f32.mxu0 0.0
    %134 = vmatmul.mubr.f32.gmra.mrb[0].mxu0 %v56
    %v135 = vpop.f32.mrb[0].mxu0
    %v136 = vadd.f32 %v39, %v135
    %v137 = vpop.f32.mrb[0].mxu0
    %138 = vmatprep.mubr.f32.mxu0 0.0
    %139 = vmatmul.mubr.f32.gmra.mrb[0].mxu0 %v59
    %v140 = vpop.f32.mrb[0].mxu0
    %v141 = vadd.f32 %v44, %v140
    %v142 = vpop.f32.mrb[0].mxu0
    %143 = vmatprep.mubr.f32.mxu0 0.0
    %144 = vmatmul.mubr.f32.gmra.mrb[0].mxu0 %v62
    %v145 = vpop.f32.mrb[0].mxu0
    %v146 = vadd.f32 %v49, %v145
    %v147 = vpop.f32.mrb[0].mxu0
    %148 = vdwg.mxu0
    %v149 = vmax.f32 %v131, 0.0
    %v150 = vmax.f32 %v136, 0.0
    %v151 = vmax.f32 %v141, 0.0
    %v152 = vmax.f32 %v146, 0.0
    %v153 = vld [vmem:[%s3] sm:$0xf]
    %v154 = vld [vmem:[%s4] sm:$0xf]
    %156 = vset.pattern.permute.xlu0 0
    %157 = vperm.xlu0 %156, %v154
    %v158 = vpop.permute.xlu0 %157
    %vm160 = vcmask 261120
    %v162 = vsel %vm160, %v153, 0
    %164 = vmatprep.subr.mxu0 0.0
    %165 = vmatpush1.msra.mxu0 %v149
    %166 = vmatprep.subr.mxu0 0.0
    %167 = vmatpush1.msra.mxu0 %v150
    %168 = vmatprep.subr.mxu0 0.0
    %169 = vmatpush1.msra.mxu0 %v151
    %170 = vmatprep.subr.mxu0 0.0
    %171 = vmatpush1.msra.mxu0 %v152
    %172 = vmatprep.subr.mxu0 0.0
    %173 = vmatpush1.msra.mxu0 0.0
    %174 = vmatprep.subr.mxu0 0.0
    %175 = vmatpush1.msra.mxu0 0.0
    %176 = vmatprep.subr.mxu0 0.0
    %177 = vmatpush1.msra.mxu0 0.0
    %178 = vmatprep.subr.mxu0 0.0
    %179 = vmatpush1.msra.mxu0 0.0
    %180 = vmatprep.subr.mxu0 0.0
    %181 = vmatpush1.msra.mxu0 0.0
    %182 = vmatprep.subr.mxu0 0.0
    %183 = vmatpush1.msra.mxu0 0.0
    %184 = vmatprep.subr.mxu0 0.0
    %185 = vmatpush1.msra.mxu0 0.0
    %186 = vmatprep.subr.mxu0 0.0
    %187 = vmatpush1.msra.mxu0 0.0
    %188 = vmatprep.subr.mxu0 0.0
    %189 = vmatpush1.msra.mxu0 0.0
    %190 = vmatprep.subr.mxu0 0.0
    %191 = vmatpush1.msra.mxu0 0.0
    %192 = vmatprep.subr.mxu0 0.0
    %193 = vmatpush1.msra.mxu0 0.0
    %194 = vmatprep.subr.mxu0 0.0
    %195 = vmatpush1.msra.mxu0 0.0
    %196 = vmatprep.subr.mxu0 0.0
    %197 = vmatpush1.msra.mxu0 0.0
    %198 = vmatprep.subr.mxu0 0.0
    %199 = vmatpush1.msra.mxu0 0.0
    %200 = vmatprep.subr.mxu0 0.0
    %201 = vmatpush1.msra.mxu0 0.0
    %202 = vmatprep.subr.mxu0 0.0
    %203 = vmatpush1.msra.mxu0 0.0
    %204 = vmatprep.subr.mxu0 0.0
    %205 = vmatpush1.msra.mxu0 0.0
    %206 = vmatprep.subr.mxu0 0.0
    %207 = vmatpush1.msra.mxu0 0.0
    %208 = vmatprep.subr.mxu0 0.0
    %209 = vmatpush1.msra.mxu0 0.0
    %210 = vmatprep.subr.mxu0 0.0
    %211 = vmatpush1.msra.mxu0 0.0
    %212 = vmatprep.subr.mxu0 0.0
    %213 = vmatpush1.msra.mxu0 0.0
    %214 = vmatprep.subr.mxu0 0.0
    %215 = vmatpush1.msra.mxu0 0.0
    %216 = vmatprep.subr.mxu0 0.0
    %217 = vmatpush1.msra.mxu0 0.0
    %218 = vmatprep.subr.mxu0 0.0
    %219 = vmatpush1.msra.mxu0 0.0
    %220 = vmatprep.subr.mxu0 0.0
    %221 = vmatpush1.msra.mxu0 0.0
    %222 = vmatprep.subr.mxu0 0.0
    %223 = vmatpush1.msra.mxu0 0.0
    %224 = vmatprep.subr.mxu0 0.0
    %225 = vmatpush1.msra.mxu0 0.0
    %226 = vmatprep.subr.mxu0 0.0
    %227 = vmatpush1.msra.mxu0 0.0
    %228 = vmatprep.mubr.f32.mxu0 0.0
    %229 = vmatmul.mubr.f32.gmra.mrb[0].mxu0 %v162
    %v230 = vpop.f32.mrb[0].mxu0
    %v231 = vadd.f32 %v158, %v230
    %v232 = vpop.f32.mrb[0].mxu0
    %233 = vdwg.mxu0
    %v235 = vrot.slane %v231, 1
    %v237 = vmax.f32 %v231, %v235
    %v238 = vrot.slane %v231, 2
    %v240 = vmax.f32 %v237, %v238
    %v241 = vrot.slane %v231, 3
    %v243 = vmax.f32 %v240, %v241
    %v244 = vlaneseq
    %v245 = vshrl.u32 %v244, 7
    %v246 = vsub.s32 0, %v245
    %v247 = vrot.slane %v243, %v246
    %v248 = vsub.f32 %v231, %v247
    %v249 = vmul.f32 %v248, 1.442695
    %v250 = vpow.pop %v249
    %v252 = vrot.slane %v250, 1
    %v254 = vadd.f32 %v250, %v252
    %v255 = vrot.slane %v250, 2
    %v257 = vadd.f32 %v254, %v255
    %v258 = vrot.slane %v250, 3
    %v260 = vadd.f32 %v257, %v258
    %v261 = vlaneseq
    %v262 = vshrl.u32 %v261, 7
    %v263 = vsub.s32 0, %v262
    %v264 = vrot.slane %v260, %v263
    %v265 = vrcp.pop %v264
    %v266 = vmul.f32 %v250, %v265
    %vm267 = vcmask 60416
    %268 = vst.msk [vmem:[#allocation2] sm:$0xf] %vm267, %v266
    // Predicated region
    $region22: #{tpu_custom_call.1} parent=1 // pred_check
      _
    $region23: #{tpu_custom_call.1} parent=1 // pred_check_branch
      %270 = sbr.rel (0) target = $region25
    $region24: #{tpu_custom_call.1} parent=1 // pred_region
      %s272 = ssub.s32 64, 64
      %273 = vsyncadd [#allocation3], %s272
      %s275 = sshll.u32 [#allocation2], 4
      %s276 = int_to_ptr.vmem [resolvable:$true] %s275
      %278 = dma.vmem_to_hbm [thread:$0]  %s276, 64, %s5, [#allocation3]
    $region25: #{tpu_custom_call.1} parent=1 // pred_fallthru
      _
    // Predicated region
    $region26: #{tpu_custom_call.1} parent=1 // pred_check
      _
    $region27: #{tpu_custom_call.1} parent=1 // pred_check_branch
      %280 = sbr.rel (0) target = $region29
    $region28: #{tpu_custom_call.1} parent=1 // pred_region
      %281 = dma.done [#allocation3], 64
    $region29: #{tpu_custom_call.1} parent=1 // pred_fallthru
      _
    %282 = vsyncpa [#allocation3], 1

</llo_original>
